<compile_context>
chip_gen: v5e
topology: v5e:2x2
jax: 0.10.0
libtpu: 0.0.40
codegen_flags: <defaults>
</compile_context>

<pallas_src>
import jax
import jax.numpy as jnp
import numpy as np
from jax.experimental import pallas as pl
from jax.experimental.pallas import tpu as pltpu

POOL = 5          # avg_pool2d kernel == stride
OUTSP = 3         # pooled spatial extent (15 / 5)
C_IN = 64
FEAT = C_IN * OUTSP * OUTSP   # 576
N_OUT = 5


# ---------------------------------------------------------------------------
# Pallas kernel: fused avg_pool(5,5) + flatten + Linear(576, 5)
# ---------------------------------------------------------------------------
def _outlayer_kernel(x_ref, w_ref, b_ref, o_ref):
    # x_ref: (nb, 15, 15, 64)  NHWC activation tile (VMEM)
    # w_ref: (9, 64, 5)        per-pool-tap weight slabs (VMEM, pinned)
    # b_ref: (1, 5)            bias
    # o_ref: (nb, 5)
    nb = x_ref.shape[0]
    acc = jnp.zeros((nb, o_ref.shape[1]), jnp.float32)
    inv_area = 1.0 / float(POOL * POOL)
    for s in range(OUTSP * OUTSP):          # 9 pooled positions, static unroll
        oh, ow = divmod(s, OUTSP)
        win = x_ref[:, POOL * oh:POOL * (oh + 1), POOL * ow:POOL * (ow + 1), :]
        pooled = win.sum(axis=1).sum(axis=1) * inv_area          # (nb, 64)
        acc = acc + jnp.dot(pooled, w_ref[s],                     # (nb, 5)
                            preferred_element_type=jnp.float32)
    o_ref[...] = acc + b_ref[...]


# ---------------------------------------------------------------------------
# Wrapper: PyTorch-convention NCHW input, (5, 576) weight, (5,) bias
# ---------------------------------------------------------------------------
def outlayer_forward(x_nchw, weight, bias):
    N, C, H, W = x_nchw.shape
    assert C == C_IN and H % POOL == 0 and W % POOL == 0
    assert (H // POOL) == OUTSP and (W // POOL) == OUTSP

    x = jnp.transpose(x_nchw, (0, 2, 3, 1)).astype(jnp.float32)   # NCHW -> NHWC

    # PyTorch flatten order is c*9 + oh*3 + ow; regroup W once into (9, 64, 5) taps.
    w_taps = weight.reshape(N_OUT, C_IN, OUTSP * OUTSP).transpose(2, 1, 0)
    b2 = bias.reshape(1, N_OUT).astype(jnp.float32)

    # Batch tiling: single block for small N, 64-row blocks (8-aligned) otherwise.
    nb = N if N <= 64 else 64
    grid = (pl.cdiv(N, nb),)

    return pl.pallas_call(
        _outlayer_kernel,
        out_shape=jax.ShapeDtypeStruct((N, N_OUT), jnp.float32),
        grid_spec=pltpu.PrefetchScalarGridSpec(
            num_scalar_prefetch=0,
            grid=grid,
            in_specs=[
                pl.BlockSpec((nb, H, W, C_IN), lambda i: (i, 0, 0, 0)),
                pl.BlockSpec((OUTSP * OUTSP, C_IN, N_OUT), lambda i: (0, 0, 0)),
                pl.BlockSpec((1, N_OUT), lambda i: (0, 0)),
            ],
            out_specs=pl.BlockSpec((nb, N_OUT), lambda i: (i, 0)),
        ),
        compiler_params=pltpu.CompilerParams(
            dimension_semantics=("parallel",),        # shard batch across TCs on v7x
            vmem_limit_bytes=32 * 1024 * 1024,
        ),
    )(x, w_taps.astype(jnp.float32), b2)


# ---------------------------------------------------------------------------
# Pure numpy reference (float64) mirroring the PyTorch forward exactly
# ---------------------------------------------------------------------------
def reference_forward(x_nchw, weight, bias):
    xn = np.asarray(x_nchw, np.float64)
    N, C, H, W = xn.shape
    pooled = xn.reshape(N, C, OUTSP, POOL, OUTSP, POOL).mean(axis=(3, 5))  # (N,64,3,3)
    flat = pooled.reshape(N, -1)                                            # (N,576)
    return flat @ np.asarray(weight, np.float64).T + np.asarray(bias, np.float64)


if __name__ == "__main__":
    key = jax.random.PRNGKey(0)
    kx, kw, kb = jax.random.split(key, 3)

    # Shapes implied by the module: Linear(64*3*3, 5) after avg_pool2d(5,5) -> 15x15 input.
    x = jax.random.normal(kx, (2, C_IN, 15, 15), jnp.float32)
    bound = 1.0 / np.sqrt(FEAT)                      # nn.Linear default init range
    weight = jax.random.uniform(kw, (N_OUT, FEAT), jnp.float32, -bound, bound)
    bias = jax.random.uniform(kb, (N_OUT,), jnp.float32, -bound, bound)

    out = jax.jit(outlayer_forward)(x, weight, bias)
    out = jax.block_until_ready(out)

    ref = reference_forward(x, weight, bias)
    assert out.shape == (2, N_OUT), out.shape
    np.testing.assert_allclose(np.asarray(out), ref, rtol=2e-2, atol=2e-3)
    print("KERNEL_OK")
</pallas_src>

<mosaic_0001>
module attributes {stable_mosaic.version = 11 : i64} {
  func.func @_outlayer_kernel(%arg0: i32, %arg1: memref<2x15x15x64xf32, #tpu.memory_space<vmem>>, %arg2: memref<9x64x5xf32, #tpu.memory_space<vmem>>, %arg3: memref<1x5xf32, #tpu.memory_space<vmem>>, %arg4: memref<2x5xf32, #tpu.memory_space<vmem>>) attributes {dimension_semantics = [#tpu.dimension_semantics<parallel>], iteration_bounds = array<i64: 1>, scalar_prefetch = 0 : i64, scratch_operands = 0 : i64, tpu.core_type = #tpu.core_type<tc>, window_params = [{transform_indices = @transform_0, window_bounds = array<i64: 2, 15, 15, 64>}, {pipeline_mode = #tpu.pipeline_mode<synchronous>, transform_indices = @transform_1, window_bounds = array<i64: 9, 64, 5>}, {pipeline_mode = #tpu.pipeline_mode<synchronous>, transform_indices = @transform_2, window_bounds = array<i64: 1, 5>}, {transform_indices = @transform_3, window_bounds = array<i64: 2, 5>}]} {
    %cst = arith.constant 0.000000e+00 : f32
    %0 = vector.broadcast %cst : f32 to vector<2x5xf32>
    %c0 = arith.constant 0 : index
    %c0_0 = arith.constant 0 : index
    %c0_1 = arith.constant 0 : index
    %c0_2 = arith.constant 0 : index
    %1 = vector.load %arg1[%c0, %c0_0, %c0_1, %c0_2] : memref<2x15x15x64xf32, #tpu.memory_space<vmem>>, vector<2x5x5x64xf32>
    %cst_3 = arith.constant dense<0.000000e+00> : vector<2x5x64xf32>
    %2 = vector.multi_reduction <add>, %1, %cst_3 [1] : vector<2x5x5x64xf32> to vector<2x5x64xf32>
    %cst_4 = arith.constant dense<0.000000e+00> : vector<2x64xf32>
    %3 = vector.multi_reduction <add>, %2, %cst_4 [1] : vector<2x5x64xf32> to vector<2x64xf32>
    %cst_5 = arith.constant 4.000000e-02 : f32
    %4 = vector.broadcast %cst_5 : f32 to vector<2x64xf32>
    %5 = arith.mulf %3, %4 : vector<2x64xf32>
    %c0_6 = arith.constant 0 : index
    %c0_7 = arith.constant 0 : index
    %c0_8 = arith.constant 0 : index
    %6 = vector.load %arg2[%c0_6, %c0_7, %c0_8] : memref<9x64x5xf32, #tpu.memory_space<vmem>>, vector<1x64x5xf32>
    %7 = vector.shape_cast %6 : vector<1x64x5xf32> to vector<64x5xf32>
    %cst_9 = arith.constant dense<0.000000e+00> : vector<2x5xf32>
    %8 = tpu.matmul %5, %7, %cst_9 {dimension_numbers = #tpu.dot_dimension_numbers<[1], [0], [0], [1], [0, 0, 1, 1], [], []>} : vector<2x64xf32>, vector<64x5xf32>, vector<2x5xf32> -> vector<2x5xf32>
    %9 = arith.addf %0, %8 : vector<2x5xf32>
    %c0_10 = arith.constant 0 : index
    %c0_11 = arith.constant 0 : index
    %c5 = arith.constant 5 : index
    %c0_12 = arith.constant 0 : index
    %10 = vector.load %arg1[%c0_10, %c0_11, %c5, %c0_12] : memref<2x15x15x64xf32, #tpu.memory_space<vmem>>, vector<2x5x5x64xf32>
    %cst_13 = arith.constant dense<0.000000e+00> : vector<2x5x64xf32>
    %11 = vector.multi_reduction <add>, %10, %cst_13 [1] : vector<2x5x5x64xf32> to vector<2x5x64xf32>
    %cst_14 = arith.constant dense<0.000000e+00> : vector<2x64xf32>
    %12 = vector.multi_reduction <add>, %11, %cst_14 [1] : vector<2x5x64xf32> to vector<2x64xf32>
    %cst_15 = arith.constant 4.000000e-02 : f32
    %13 = vector.broadcast %cst_15 : f32 to vector<2x64xf32>
    %14 = arith.mulf %12, %13 : vector<2x64xf32>
    %c1 = arith.constant 1 : index
    %c0_16 = arith.constant 0 : index
    %c0_17 = arith.constant 0 : index
    %15 = vector.load %arg2[%c1, %c0_16, %c0_17] : memref<9x64x5xf32, #tpu.memory_space<vmem>>, vector<1x64x5xf32>
    %16 = vector.shape_cast %15 : vector<1x64x5xf32> to vector<64x5xf32>
    %cst_18 = arith.constant dense<0.000000e+00> : vector<2x5xf32>
    %17 = tpu.matmul %14, %16, %cst_18 {dimension_numbers = #tpu.dot_dimension_numbers<[1], [0], [0], [1], [0, 0, 1, 1], [], []>} : vector<2x64xf32>, vector<64x5xf32>, vector<2x5xf32> -> vector<2x5xf32>
    %18 = arith.addf %9, %17 : vector<2x5xf32>
    %c0_19 = arith.constant 0 : index
    %c0_20 = arith.constant 0 : index
    %c10 = arith.constant 10 : index
    %c0_21 = arith.constant 0 : index
    %19 = vector.load %arg1[%c0_19, %c0_20, %c10, %c0_21] : memref<2x15x15x64xf32, #tpu.memory_space<vmem>>, vector<2x5x5x64xf32>
    %cst_22 = arith.constant dense<0.000000e+00> : vector<2x5x64xf32>
    %20 = vector.multi_reduction <add>, %19, %cst_22 [1] : vector<2x5x5x64xf32> to vector<2x5x64xf32>
    %cst_23 = arith.constant dense<0.000000e+00> : vector<2x64xf32>
    %21 = vector.multi_reduction <add>, %20, %cst_23 [1] : vector<2x5x64xf32> to vector<2x64xf32>
    %cst_24 = arith.constant 4.000000e-02 : f32
    %22 = vector.broadcast %cst_24 : f32 to vector<2x64xf32>
    %23 = arith.mulf %21, %22 : vector<2x64xf32>
    %c2 = arith.constant 2 : index
    %c0_25 = arith.constant 0 : index
    %c0_26 = arith.constant 0 : index
    %24 = vector.load %arg2[%c2, %c0_25, %c0_26] : memref<9x64x5xf32, #tpu.memory_space<vmem>>, vector<1x64x5xf32>
    %25 = vector.shape_cast %24 : vector<1x64x5xf32> to vector<64x5xf32>
    %cst_27 = arith.constant dense<0.000000e+00> : vector<2x5xf32>
    %26 = tpu.matmul %23, %25, %cst_27 {dimension_numbers = #tpu.dot_dimension_numbers<[1], [0], [0], [1], [0, 0, 1, 1], [], []>} : vector<2x64xf32>, vector<64x5xf32>, vector<2x5xf32> -> vector<2x5xf32>
    %27 = arith.addf %18, %26 : vector<2x5xf32>
    %c0_28 = arith.constant 0 : index
    %c5_29 = arith.constant 5 : index
    %c0_30 = arith.constant 0 : index
    %c0_31 = arith.constant 0 : index
    %28 = vector.load %arg1[%c0_28, %c5_29, %c0_30, %c0_31] : memref<2x15x15x64xf32, #tpu.memory_space<vmem>>, vector<2x5x5x64xf32>
    %cst_32 = arith.constant dense<0.000000e+00> : vector<2x5x64xf32>
    %29 = vector.multi_reduction <add>, %28, %cst_32 [1] : vector<2x5x5x64xf32> to vector<2x5x64xf32>
    %cst_33 = arith.constant dense<0.000000e+00> : vector<2x64xf32>
    %30 = vector.multi_reduction <add>, %29, %cst_33 [1] : vector<2x5x64xf32> to vector<2x64xf32>
    %cst_34 = arith.constant 4.000000e-02 : f32
    %31 = vector.broadcast %cst_34 : f32 to vector<2x64xf32>
    %32 = arith.mulf %30, %31 : vector<2x64xf32>
    %c3 = arith.constant 3 : index
    %c0_35 = arith.constant 0 : index
    %c0_36 = arith.constant 0 : index
    %33 = vector.load %arg2[%c3, %c0_35, %c0_36] : memref<9x64x5xf32, #tpu.memory_space<vmem>>, vector<1x64x5xf32>
    %34 = vector.shape_cast %33 : vector<1x64x5xf32> to vector<64x5xf32>
    %cst_37 = arith.constant dense<0.000000e+00> : vector<2x5xf32>
    %35 = tpu.matmul %32, %34, %cst_37 {dimension_numbers = #tpu.dot_dimension_numbers<[1], [0], [0], [1], [0, 0, 1, 1], [], []>} : vector<2x64xf32>, vector<64x5xf32>, vector<2x5xf32> -> vector<2x5xf32>
    %36 = arith.addf %27, %35 : vector<2x5xf32>
    %c0_38 = arith.constant 0 : index
    %c5_39 = arith.constant 5 : index
    %c5_40 = arith.constant 5 : index
    %c0_41 = arith.constant 0 : index
    %37 = vector.load %arg1[%c0_38, %c5_39, %c5_40, %c0_41] : memref<2x15x15x64xf32, #tpu.memory_space<vmem>>, vector<2x5x5x64xf32>
    %cst_42 = arith.constant dense<0.000000e+00> : vector<2x5x64xf32>
    %38 = vector.multi_reduction <add>, %37, %cst_42 [1] : vector<2x5x5x64xf32> to vector<2x5x64xf32>
    %cst_43 = arith.constant dense<0.000000e+00> : vector<2x64xf32>
    %39 = vector.multi_reduction <add>, %38, %cst_43 [1] : vector<2x5x64xf32> to vector<2x64xf32>
    %cst_44 = arith.constant 4.000000e-02 : f32
    %40 = vector.broadcast %cst_44 : f32 to vector<2x64xf32>
    %41 = arith.mulf %39, %40 : vector<2x64xf32>
    %c4 = arith.constant 4 : index
    %c0_45 = arith.constant 0 : index
    %c0_46 = arith.constant 0 : index
    %42 = vector.load %arg2[%c4, %c0_45, %c0_46] : memref<9x64x5xf32, #tpu.memory_space<vmem>>, vector<1x64x5xf32>
    %43 = vector.shape_cast %42 : vector<1x64x5xf32> to vector<64x5xf32>
    %cst_47 = arith.constant dense<0.000000e+00> : vector<2x5xf32>
    %44 = tpu.matmul %41, %43, %cst_47 {dimension_numbers = #tpu.dot_dimension_numbers<[1], [0], [0], [1], [0, 0, 1, 1], [], []>} : vector<2x64xf32>, vector<64x5xf32>, vector<2x5xf32> -> vector<2x5xf32>
    %45 = arith.addf %36, %44 : vector<2x5xf32>
    %c0_48 = arith.constant 0 : index
    %c5_49 = arith.constant 5 : index
    %c10_50 = arith.constant 10 : index
    %c0_51 = arith.constant 0 : index
    %46 = vector.load %arg1[%c0_48, %c5_49, %c10_50, %c0_51] : memref<2x15x15x64xf32, #tpu.memory_space<vmem>>, vector<2x5x5x64xf32>
    %cst_52 = arith.constant dense<0.000000e+00> : vector<2x5x64xf32>
    %47 = vector.multi_reduction <add>, %46, %cst_52 [1] : vector<2x5x5x64xf32> to vector<2x5x64xf32>
    %cst_53 = arith.constant dense<0.000000e+00> : vector<2x64xf32>
    %48 = vector.multi_reduction <add>, %47, %cst_53 [1] : vector<2x5x64xf32> to vector<2x64xf32>
    %cst_54 = arith.constant 4.000000e-02 : f32
    %49 = vector.broadcast %cst_54 : f32 to vector<2x64xf32>
    %50 = arith.mulf %48, %49 : vector<2x64xf32>
    %c5_55 = arith.constant 5 : index
    %c0_56 = arith.constant 0 : index
    %c0_57 = arith.constant 0 : index
    %51 = vector.load %arg2[%c5_55, %c0_56, %c0_57] : memref<9x64x5xf32, #tpu.memory_space<vmem>>, vector<1x64x5xf32>
    %52 = vector.shape_cast %51 : vector<1x64x5xf32> to vector<64x5xf32>
    %cst_58 = arith.constant dense<0.000000e+00> : vector<2x5xf32>
    %53 = tpu.matmul %50, %52, %cst_58 {dimension_numbers = #tpu.dot_dimension_numbers<[1], [0], [0], [1], [0, 0, 1, 1], [], []>} : vector<2x64xf32>, vector<64x5xf32>, vector<2x5xf32> -> vector<2x5xf32>
    %54 = arith.addf %45, %53 : vector<2x5xf32>
    %c0_59 = arith.constant 0 : index
    %c10_60 = arith.constant 10 : index
    %c0_61 = arith.constant 0 : index
    %c0_62 = arith.constant 0 : index
    %55 = vector.load %arg1[%c0_59, %c10_60, %c0_61, %c0_62] : memref<2x15x15x64xf32, #tpu.memory_space<vmem>>, vector<2x5x5x64xf32>
    %cst_63 = arith.constant dense<0.000000e+00> : vector<2x5x64xf32>
    %56 = vector.multi_reduction <add>, %55, %cst_63 [1] : vector<2x5x5x64xf32> to vector<2x5x64xf32>
    %cst_64 = arith.constant dense<0.000000e+00> : vector<2x64xf32>
    %57 = vector.multi_reduction <add>, %56, %cst_64 [1] : vector<2x5x64xf32> to vector<2x64xf32>
    %cst_65 = arith.constant 4.000000e-02 : f32
    %58 = vector.broadcast %cst_65 : f32 to vector<2x64xf32>
    %59 = arith.mulf %57, %58 : vector<2x64xf32>
    %c6 = arith.constant 6 : index
    %c0_66 = arith.constant 0 : index
    %c0_67 = arith.constant 0 : index
    %60 = vector.load %arg2[%c6, %c0_66, %c0_67] : memref<9x64x5xf32, #tpu.memory_space<vmem>>, vector<1x64x5xf32>
    %61 = vector.shape_cast %60 : vector<1x64x5xf32> to vector<64x5xf32>
    %cst_68 = arith.constant dense<0.000000e+00> : vector<2x5xf32>
    %62 = tpu.matmul %59, %61, %cst_68 {dimension_numbers = #tpu.dot_dimension_numbers<[1], [0], [0], [1], [0, 0, 1, 1], [], []>} : vector<2x64xf32>, vector<64x5xf32>, vector<2x5xf32> -> vector<2x5xf32>
    %63 = arith.addf %54, %62 : vector<2x5xf32>
    %c0_69 = arith.constant 0 : index
    %c10_70 = arith.constant 10 : index
    %c5_71 = arith.constant 5 : index
    %c0_72 = arith.constant 0 : index
    %64 = vector.load %arg1[%c0_69, %c10_70, %c5_71, %c0_72] : memref<2x15x15x64xf32, #tpu.memory_space<vmem>>, vector<2x5x5x64xf32>
    %cst_73 = arith.constant dense<0.000000e+00> : vector<2x5x64xf32>
    %65 = vector.multi_reduction <add>, %64, %cst_73 [1] : vector<2x5x5x64xf32> to vector<2x5x64xf32>
    %cst_74 = arith.constant dense<0.000000e+00> : vector<2x64xf32>
    %66 = vector.multi_reduction <add>, %65, %cst_74 [1] : vector<2x5x64xf32> to vector<2x64xf32>
    %cst_75 = arith.constant 4.000000e-02 : f32
    %67 = vector.broadcast %cst_75 : f32 to vector<2x64xf32>
    %68 = arith.mulf %66, %67 : vector<2x64xf32>
    %c7 = arith.constant 7 : index
    %c0_76 = arith.constant 0 : index
    %c0_77 = arith.constant 0 : index
    %69 = vector.load %arg2[%c7, %c0_76, %c0_77] : memref<9x64x5xf32, #tpu.memory_space<vmem>>, vector<1x64x5xf32>
    %70 = vector.shape_cast %69 : vector<1x64x5xf32> to vector<64x5xf32>
    %cst_78 = arith.constant dense<0.000000e+00> : vector<2x5xf32>
    %71 = tpu.matmul %68, %70, %cst_78 {dimension_numbers = #tpu.dot_dimension_numbers<[1], [0], [0], [1], [0, 0, 1, 1], [], []>} : vector<2x64xf32>, vector<64x5xf32>, vector<2x5xf32> -> vector<2x5xf32>
    %72 = arith.addf %63, %71 : vector<2x5xf32>
    %c0_79 = arith.constant 0 : index
    %c10_80 = arith.constant 10 : index
    %c10_81 = arith.constant 10 : index
    %c0_82 = arith.constant 0 : index
    %73 = vector.load %arg1[%c0_79, %c10_80, %c10_81, %c0_82] : memref<2x15x15x64xf32, #tpu.memory_space<vmem>>, vector<2x5x5x64xf32>
    %cst_83 = arith.constant dense<0.000000e+00> : vector<2x5x64xf32>
    %74 = vector.multi_reduction <add>, %73, %cst_83 [1] : vector<2x5x5x64xf32> to vector<2x5x64xf32>
    %cst_84 = arith.constant dense<0.000000e+00> : vector<2x64xf32>
    %75 = vector.multi_reduction <add>, %74, %cst_84 [1] : vector<2x5x64xf32> to vector<2x64xf32>
    %cst_85 = arith.constant 4.000000e-02 : f32
    %76 = vector.broadcast %cst_85 : f32 to vector<2x64xf32>
    %77 = arith.mulf %75, %76 : vector<2x64xf32>
    %c8 = arith.constant 8 : index
    %c0_86 = arith.constant 0 : index
    %c0_87 = arith.constant 0 : index
    %78 = vector.load %arg2[%c8, %c0_86, %c0_87] : memref<9x64x5xf32, #tpu.memory_space<vmem>>, vector<1x64x5xf32>
    %79 = vector.shape_cast %78 : vector<1x64x5xf32> to vector<64x5xf32>
    %cst_88 = arith.constant dense<0.000000e+00> : vector<2x5xf32>
    %80 = tpu.matmul %77, %79, %cst_88 {dimension_numbers = #tpu.dot_dimension_numbers<[1], [0], [0], [1], [0, 0, 1, 1], [], []>} : vector<2x64xf32>, vector<64x5xf32>, vector<2x5xf32> -> vector<2x5xf32>
    %81 = arith.addf %72, %80 : vector<2x5xf32>
    %c0_89 = arith.constant 0 : index
    %c0_90 = arith.constant 0 : index
    %82 = vector.load %arg3[%c0_89, %c0_90] : memref<1x5xf32, #tpu.memory_space<vmem>>, vector<1x5xf32>
    %83 = vector.broadcast %82 : vector<1x5xf32> to vector<2x5xf32>
    %84 = arith.addf %81, %83 : vector<2x5xf32>
    %c0_91 = arith.constant 0 : index
    %c0_92 = arith.constant 0 : index
    %85 = vector.load %arg4[%c0_91, %c0_92] : memref<2x5xf32, #tpu.memory_space<vmem>>, vector<2x5xf32>
    tpu.vector_store %arg4[%c0_91, %c0_92], %84 {strides = array<i32>} : memref<2x5xf32, #tpu.memory_space<vmem>>, vector<2x5xf32>,
    return
  }
  func.func @transform_0(%arg0: i32) -> (i32, i32, i32, i32) {
    %c0_i32 = arith.constant 0 : i32
    %c0_i32_0 = arith.constant 0 : i32
    %c0_i32_1 = arith.constant 0 : i32
    %c0_i32_2 = arith.constant 0 : i32
    return %arg0, %c0_i32, %c0_i32_0, %c0_i32_1 : i32, i32, i32, i32
  }
  func.func @transform_1(%arg0: i32) -> (i32, i32, i32) {
    %c0_i32 = arith.constant 0 : i32
    %c0_i32_0 = arith.constant 0 : i32
    %c0_i32_1 = arith.constant 0 : i32
    %c0_i32_2 = arith.constant 0 : i32
    return %c0_i32, %c0_i32_0, %c0_i32_1 : i32, i32, i32
  }
  func.func @transform_2(%arg0: i32) -> (i32, i32) {
    %c0_i32 = arith.constant 0 : i32
    %c0_i32_0 = arith.constant 0 : i32
    %c0_i32_1 = arith.constant 0 : i32
    return %c0_i32, %c0_i32_0 : i32, i32
  }
  func.func @transform_3(%arg0: i32) -> (i32, i32) {
    %c0_i32 = arith.constant 0 : i32
    %c0_i32_0 = arith.constant 0 : i32
    return %arg0, %c0_i32 : i32, i32
  }
}

</mosaic_0001>

<llo_original>
// kernel: outlayer_forward.1
$region0: #{outlayer_forward.1}
  #allocation0 [shape = 'u32[]', space=smem, size = 0x4, offset = 0x4, fixed_abs, tag = 'smem constant byte address 0x4 - core index']
  #allocation1 [shape = 'u32[72,128]{1,0:T(1,128)}', space=vmem, size = 0x9000, scoped, tag = 'internal scratch']
  %s0 = inlined_call_operand.vmem [shape: f32[2,15,15,64], index: 0, kind: input, shape index: {}]
  %s1 = inlined_call_operand.vmem [shape: f32[9,64,5], index: 1, kind: input, shape index: {}]
  %s2 = inlined_call_operand.vmem [shape: f32[1,5], index: 2, kind: input, shape index: {}]
  %s3 = inlined_call_operand.hbm [shape: f32[2,5], index: 3, kind: output, shape index: {}]
  %s4 = sld [smem:[#allocation0]]
  $region22: #{outlayer_forward.1} parent=0
    _
  %s6 = ssub.s32 1, %s4
  %s7 = scalar_select 0, %s6, %s4
  $region1: #{outlayer_forward.1} parent=0
    #allocation2 [shape = 'u8[1024]{0}', space=vmem, size = 0x400, scoped, tag = 'output window, operand 0, single buffered']
    #allocation3 [shape = 's32[1]{0}', space=sflag, size = 0x4, scoped, tag = 'scoped memory for outlayer_forward.1']
    %8 = vsyncpa [#allocation3], 0
    // Predicated region
    $region2: #{outlayer_forward.1} parent=1 // pred_check
      _
    $region3: #{outlayer_forward.1} parent=1 // pred_check_branch
      %10 = sbr.rel (0) target = $region5
    $region4: #{outlayer_forward.1} parent=1 // pred_region
      _
    $region5: #{outlayer_forward.1} parent=1 // pred_fallthru
      _
    // Predicated region
    $region6: #{outlayer_forward.1} parent=1 // pred_check
      _
    $region7: #{outlayer_forward.1} parent=1 // pred_check_branch
      %12 = sbr.rel (0) target = $region9
    $region8: #{outlayer_forward.1} parent=1 // pred_region
      _
    $region9: #{outlayer_forward.1} parent=1 // pred_fallthru
      _
    // Predicated region
    $region10: #{outlayer_forward.1} parent=1 // pred_check
      _
    $region11: #{outlayer_forward.1} parent=1 // pred_check_branch
      %14 = sbr.rel (0) target = $region13
    $region12: #{outlayer_forward.1} parent=1 // pred_region
      _
    $region13: #{outlayer_forward.1} parent=1 // pred_fallthru
      _
    %v15 = vld [vmem:[%s0] sm:$0x1f]
    %v16 = vld [vmem:[%s0 + $0x10] sm:$0x1f]
    %v17 = vld [vmem:[%s0 + $0x20] sm:$0x1f]
    %v18 = vld [vmem:[%s0 + $0x30] sm:$0x1f]
    %v19 = vld [vmem:[%s0 + $0x40] sm:$0x1f]
    %v20 = vld [vmem:[%s0 + $0xf0] sm:$0x1f]
    %v21 = vld [vmem:[%s0 + $0x100] sm:$0x1f]
    %v22 = vld [vmem:[%s0 + $0x110] sm:$0x1f]
    %v23 = vld [vmem:[%s0 + $0x120] sm:$0x1f]
    %v24 = vld [vmem:[%s0 + $0x130] sm:$0x1f]
    %vm25 = vcmask 520192
    %v26 = vsel %vm25, %v15, 0.0
    %v27 = vsel %vm25, %v16, 0.0
    %v28 = vadd.f32 %v26, %v27
    %v29 = vsel %vm25, %v17, 0.0
    %v30 = vadd.f32 %v28, %v29
    %v31 = vsel %vm25, %v18, 0.0
    %v32 = vadd.f32 %v30, %v31
    %v33 = vsel %vm25, %v19, 0.0
    %v34 = vadd.f32 %v32, %v33
    %v35 = vsel %vm25, %v20, 0.0
    %v36 = vsel %vm25, %v21, 0.0
    %v37 = vadd.f32 %v35, %v36
    %v38 = vsel %vm25, %v22, 0.0
    %v39 = vadd.f32 %v37, %v38
    %v40 = vsel %vm25, %v23, 0.0
    %v41 = vadd.f32 %v39, %v40
    %v42 = vsel %vm25, %v24, 0.0
    %v43 = vadd.f32 %v41, %v42
    %v44 = vsel %vm25, %v34, 0.0
    %v45 = vrot.slane %v44, 4
    %v46 = vadd.f32 %v44, %v45
    %v47 = vrot.slane %v46, 2
    %v48 = vadd.f32 %v46, %v47
    %v49 = vrot.slane %v48, 1
    %v50 = vadd.f32 %v48, %v49
    %v51 = vsel %vm25, %v43, 0.0
    %v52 = vrot.slane %v51, 4
    %v53 = vadd.f32 %v51, %v52
    %v54 = vrot.slane %v53, 2
    %v55 = vadd.f32 %v53, %v54
    %v56 = vrot.slane %v55, 1
    %v57 = vadd.f32 %v55, %v56
    %v58 = vmul.f32 %v50, 0.04
    %v59 = vmul.f32 %v57, 0.04
    %v60 = vld [vmem:[%s1] sm:$0xff]
    %v61 = vld [vmem:[%s1 + $0x8] sm:$0xff]
    %v62 = vld [vmem:[%s1 + $0x10] sm:$0xff]
    %v63 = vld [vmem:[%s1 + $0x18] sm:$0xff]
    %v64 = vld [vmem:[%s1 + $0x20] sm:$0xff]
    %v65 = vld [vmem:[%s1 + $0x28] sm:$0xff]
    %v66 = vld [vmem:[%s1 + $0x30] sm:$0xff]
    %v67 = vld [vmem:[%s1 + $0x38] sm:$0xff]
    %v68 = vld [vmem:[%s0 + $0x5] sm:$0x1f]
    %v69 = vld [vmem:[%s0 + $0x15] sm:$0x1f]
    %v70 = vld [vmem:[%s0 + $0x25] sm:$0x1f]
    %v71 = vld [vmem:[%s0 + $0x35] sm:$0x1f]
    %v72 = vld [vmem:[%s0 + $0x45] sm:$0x1f]
    %v73 = vld [vmem:[%s0 + $0xf5] sm:$0x1f]
    %v74 = vld [vmem:[%s0 + $0x105] sm:$0x1f]
    %v75 = vld [vmem:[%s0 + $0x115] sm:$0x1f]
    %v76 = vld [vmem:[%s0 + $0x125] sm:$0x1f]
    %v77 = vld [vmem:[%s0 + $0x135] sm:$0x1f]
    %v78 = vsel %vm25, %v68, 0.0
    %v79 = vsel %vm25, %v69, 0.0
    %v80 = vadd.f32 %v78, %v79
    %v81 = vsel %vm25, %v70, 0.0
    %v82 = vadd.f32 %v80, %v81
    %v83 = vsel %vm25, %v71, 0.0
    %v84 = vadd.f32 %v82, %v83
    %v85 = vsel %vm25, %v72, 0.0
    %v86 = vadd.f32 %v84, %v85
    %v87 = vsel %vm25, %v73, 0.0
    %v88 = vsel %vm25, %v74, 0.0
    %v89 = vadd.f32 %v87, %v88
    %v90 = vsel %vm25, %v75, 0.0
    %v91 = vadd.f32 %v89, %v90
    %v92 = vsel %vm25, %v76, 0.0
    %v93 = vadd.f32 %v91, %v92
    %v94 = vsel %vm25, %v77, 0.0
    %v95 = vadd.f32 %v93, %v94
    %v96 = vsel %vm25, %v86, 0.0
    %v97 = vrot.slane %v96, 4
    %v98 = vadd.f32 %v96, %v97
    %v99 = vrot.slane %v98, 2
    %v100 = vadd.f32 %v98, %v99
    %v101 = vrot.slane %v100, 1
    %v102 = vadd.f32 %v100, %v101
    %v103 = vsel %vm25, %v95, 0.0
    %v104 = vrot.slane %v103, 4
    %v105 = vadd.f32 %v103, %v104
    %v106 = vrot.slane %v105, 2
    %v107 = vadd.f32 %v105, %v106
    %v108 = vrot.slane %v107, 1
    %v109 = vadd.f32 %v107, %v108
    %v110 = vmul.f32 %v102, 0.04
    %v111 = vmul.f32 %v109, 0.04
    %s112 = scalar_lea.vmem %s1, 64
    %v113 = vld [vmem:[%s112] sm:$0xff]
    %v114 = vld [vmem:[%s112 + $0x8] sm:$0xff]
    %v115 = vld [vmem:[%s112 + $0x10] sm:$0xff]
    %v116 = vld [vmem:[%s112 + $0x18] sm:$0xff]
    %v117 = vld [vmem:[%s112 + $0x20] sm:$0xff]
    %v118 = vld [vmem:[%s112 + $0x28] sm:$0xff]
    %v119 = vld [vmem:[%s112 + $0x30] sm:$0xff]
    %v120 = vld [vmem:[%s112 + $0x38] sm:$0xff]
    %vm123 = vcmask 1041409
    %v124 = vsel %vm123, %v111, %v110
    %vm125 = vcmask 523264
    %v126 = vsel %vm125, %v124, 0
    %128 = vmatpush.msra.mxu0 0.0
    %129 = vmatpush.msra.mxu0 0.0
    %130 = vmatpush.msra.mxu0 0.0
    %131 = vmatpush.msra.mxu0 0.0
    %132 = vmatpush.msra.mxu0 0.0
    %133 = vmatpush.msra.mxu0 0.0
    %134 = vmatpush.msra.mxu0 0.0
    %135 = vmatpush.msra.mxu0 0.0
    %136 = vmatpush.msra.mxu0 %v120
    %137 = vmatpush.msra.mxu0 %v119
    %138 = vmatpush.msra.mxu0 %v118
    %139 = vmatpush.msra.mxu0 %v117
    %140 = vmatpush.msra.mxu0 %v116
    %141 = vmatpush.msra.mxu0 %v115
    %142 = vmatpush.msra.mxu0 %v114
    %143 = vmatpush.msra.mxu0 %v113
    %144 = vmatmul.f32.gmra.mxu0 %v126
    %v145 = vpop.f32.mrf.mxu0
    %v146 = vadd.f32 0.0, %v145
    %147 = vdwg.mxu0
    %v150 = vsel %vm123, %v59, %v58
    %v151 = vsel %vm125, %v150, 0
    %153 = vmatpush.msra.mxu0 0.0
    %154 = vmatpush.msra.mxu0 0.0
    %155 = vmatpush.msra.mxu0 0.0
    %156 = vmatpush.msra.mxu0 0.0
    %157 = vmatpush.msra.mxu0 0.0
    %158 = vmatpush.msra.mxu0 0.0
    %159 = vmatpush.msra.mxu0 0.0
    %160 = vmatpush.msra.mxu0 0.0
    %161 = vmatpush.msra.mxu0 %v67
    %162 = vmatpush.msra.mxu0 %v66
    %163 = vmatpush.msra.mxu0 %v65
    %164 = vmatpush.msra.mxu0 %v64
    %165 = vmatpush.msra.mxu0 %v63
    %166 = vmatpush.msra.mxu0 %v62
    %167 = vmatpush.msra.mxu0 %v61
    %168 = vmatpush.msra.mxu0 %v60
    %169 = vmatmul.f32.gmra.mxu0 %v151
    %v170 = vpop.f32.mrf.mxu0
    %v171 = vadd.f32 %v146, %v170
    %172 = vdwg.mxu0
    %v173 = vld [vmem:[%s0 + $0xa] sm:$0x1f]
    %v174 = vld [vmem:[%s0 + $0x1a] sm:$0x1f]
    %v175 = vld [vmem:[%s0 + $0x2a] sm:$0x1f]
    %v176 = vld [vmem:[%s0 + $0x3a] sm:$0x1f]
    %v177 = vld [vmem:[%s0 + $0x4a] sm:$0x1f]
    %v178 = vld [vmem:[%s0 + $0xfa] sm:$0x1f]
    %v179 = vld [vmem:[%s0 + $0x10a] sm:$0x1f]
    %v180 = vld [vmem:[%s0 + $0x11a] sm:$0x1f]
    %v181 = vld [vmem:[%s0 + $0x12a] sm:$0x1f]
    %v182 = vld [vmem:[%s0 + $0x13a] sm:$0x1f]
    %v183 = vsel %vm25, %v173, 0.0
    %v184 = vsel %vm25, %v174, 0.0
    %v185 = vadd.f32 %v183, %v184
    %v186 = vsel %vm25, %v175, 0.0
    %v187 = vadd.f32 %v185, %v186
    %v188 = vsel %vm25, %v176, 0.0
    %v189 = vadd.f32 %v187, %v188
    %v190 = vsel %vm25, %v177, 0.0
    %v191 = vadd.f32 %v189, %v190
    %v192 = vsel %vm25, %v178, 0.0
    %v193 = vsel %vm25, %v179, 0.0
    %v194 = vadd.f32 %v192, %v193
    %v195 = vsel %vm25, %v180, 0.0
    %v196 = vadd.f32 %v194, %v195
    %v197 = vsel %vm25, %v181, 0.0
    %v198 = vadd.f32 %v196, %v197
    %v199 = vsel %vm25, %v182, 0.0
    %v200 = vadd.f32 %v198, %v199
    %v201 = vsel %vm25, %v191, 0.0
    %v202 = vrot.slane %v201, 4
    %v203 = vadd.f32 %v201, %v202
    %v204 = vrot.slane %v203, 2
    %v205 = vadd.f32 %v203, %v204
    %v206 = vrot.slane %v205, 1
    %v207 = vadd.f32 %v205, %v206
    %v208 = vsel %vm25, %v200, 0.0
    %v209 = vrot.slane %v208, 4
    %v210 = vadd.f32 %v208, %v209
    %v211 = vrot.slane %v210, 2
    %v212 = vadd.f32 %v210, %v211
    %v213 = vrot.slane %v212, 1
    %v214 = vadd.f32 %v212, %v213
    %v215 = vmul.f32 %v207, 0.04
    %v216 = vmul.f32 %v214, 0.04
    %s217 = scalar_lea.vmem %s1, 128
    %v218 = vld [vmem:[%s217] sm:$0xff]
    %v219 = vld [vmem:[%s217 + $0x8] sm:$0xff]
    %v220 = vld [vmem:[%s217 + $0x10] sm:$0xff]
    %v221 = vld [vmem:[%s217 + $0x18] sm:$0xff]
    %v222 = vld [vmem:[%s217 + $0x20] sm:$0xff]
    %v223 = vld [vmem:[%s217 + $0x28] sm:$0xff]
    %v224 = vld [vmem:[%s217 + $0x30] sm:$0xff]
    %v225 = vld [vmem:[%s217 + $0x38] sm:$0xff]
    %v228 = vsel %vm123, %v216, %v215
    %v229 = vsel %vm125, %v228, 0
    %231 = vmatpush.msra.mxu0 0.0
    %232 = vmatpush.msra.mxu0 0.0
    %233 = vmatpush.msra.mxu0 0.0
    %234 = vmatpush.msra.mxu0 0.0
    %235 = vmatpush.msra.mxu0 0.0
    %236 = vmatpush.msra.mxu0 0.0
    %237 = vmatpush.msra.mxu0 0.0
    %238 = vmatpush.msra.mxu0 0.0
    %239 = vmatpush.msra.mxu0 %v225
    %240 = vmatpush.msra.mxu0 %v224
    %241 = vmatpush.msra.mxu0 %v223
    %242 = vmatpush.msra.mxu0 %v222
    %243 = vmatpush.msra.mxu0 %v221
    %244 = vmatpush.msra.mxu0 %v220
    %245 = vmatpush.msra.mxu0 %v219
    %246 = vmatpush.msra.mxu0 %v218
    %247 = vmatmul.f32.gmra.mxu0 %v229
    %v248 = vpop.f32.mrf.mxu0
    %v249 = vadd.f32 0.0, %v248
    %250 = vdwg.mxu0
    %v251 = vadd.f32 %v171, %v249
    %s252 = scalar_lea.vmem %s0, 80
    %v253 = vld [vmem:[%s252] sm:$0x1f]
    %v254 = vld [vmem:[%s252 + $0x10] sm:$0x1f]
    %v255 = vld [vmem:[%s252 + $0x20] sm:$0x1f]
    %v256 = vld [vmem:[%s252 + $0x30] sm:$0x1f]
    %v257 = vld [vmem:[%s252 + $0x40] sm:$0x1f]
    %v258 = vld [vmem:[%s252 + $0xf0] sm:$0x1f]
    %v259 = vld [vmem:[%s252 + $0x100] sm:$0x1f]
    %v260 = vld [vmem:[%s252 + $0x110] sm:$0x1f]
    %v261 = vld [vmem:[%s252 + $0x120] sm:$0x1f]
    %v262 = vld [vmem:[%s252 + $0x130] sm:$0x1f]
    %v263 = vsel %vm25, %v253, 0.0
    %v264 = vsel %vm25, %v254, 0.0
    %v265 = vadd.f32 %v263, %v264
    %v266 = vsel %vm25, %v255, 0.0
    %v267 = vadd.f32 %v265, %v266
    %v268 = vsel %vm25, %v256, 0.0
    %v269 = vadd.f32 %v267, %v268
    %v270 = vsel %vm25, %v257, 0.0
    %v271 = vadd.f32 %v269, %v270
    %v272 = vsel %vm25, %v258, 0.0
    %v273 = vsel %vm25, %v259, 0.0
    %v274 = vadd.f32 %v272, %v273
    %v275 = vsel %vm25, %v260, 0.0
    %v276 = vadd.f32 %v274, %v275
    %v277 = vsel %vm25, %v261, 0.0
    %v278 = vadd.f32 %v276, %v277
    %v279 = vsel %vm25, %v262, 0.0
    %v280 = vadd.f32 %v278, %v279
    %v281 = vsel %vm25, %v271, 0.0
    %v282 = vrot.slane %v281, 4
    %v283 = vadd.f32 %v281, %v282
    %v284 = vrot.slane %v283, 2
    %v285 = vadd.f32 %v283, %v284
    %v286 = vrot.slane %v285, 1
    %v287 = vadd.f32 %v285, %v286
    %v288 = vsel %vm25, %v280, 0.0
    %v289 = vrot.slane %v288, 4
    %v290 = vadd.f32 %v288, %v289
    %v291 = vrot.slane %v290, 2
    %v292 = vadd.f32 %v290, %v291
    %v293 = vrot.slane %v292, 1
    %v294 = vadd.f32 %v292, %v293
    %v295 = vmul.f32 %v287, 0.04
    %v296 = vmul.f32 %v294, 0.04
    %s297 = scalar_lea.vmem %s1, 192
    %v298 = vld [vmem:[%s297] sm:$0xff]
    %v299 = vld [vmem:[%s297 + $0x8] sm:$0xff]
    %v300 = vld [vmem:[%s297 + $0x10] sm:$0xff]
    %v301 = vld [vmem:[%s297 + $0x18] sm:$0xff]
    %v302 = vld [vmem:[%s297 + $0x20] sm:$0xff]
    %v303 = vld [vmem:[%s297 + $0x28] sm:$0xff]
    %v304 = vld [vmem:[%s297 + $0x30] sm:$0xff]
    %v305 = vld [vmem:[%s297 + $0x38] sm:$0xff]
    %v308 = vsel %vm123, %v296, %v295
    %v309 = vsel %vm125, %v308, 0
    %311 = vmatpush.msra.mxu0 0.0
    %312 = vmatpush.msra.mxu0 0.0
    %313 = vmatpush.msra.mxu0 0.0
    %314 = vmatpush.msra.mxu0 0.0
    %315 = vmatpush.msra.mxu0 0.0
    %316 = vmatpush.msra.mxu0 0.0
    %317 = vmatpush.msra.mxu0 0.0
    %318 = vmatpush.msra.mxu0 0.0
    %319 = vmatpush.msra.mxu0 %v305
    %320 = vmatpush.msra.mxu0 %v304
    %321 = vmatpush.msra.mxu0 %v303
    %322 = vmatpush.msra.mxu0 %v302
    %323 = vmatpush.msra.mxu0 %v301
    %324 = vmatpush.msra.mxu0 %v300
    %325 = vmatpush.msra.mxu0 %v299
    %326 = vmatpush.msra.mxu0 %v298
    %327 = vmatmul.f32.gmra.mxu0 %v309
    %v328 = vpop.f32.mrf.mxu0
    %v329 = vadd.f32 0.0, %v328
    %330 = vdwg.mxu0
    %v331 = vadd.f32 %v251, %v329
    %v332 = vld [vmem:[%s252 + $0x5] sm:$0x1f]
    %v333 = vld [vmem:[%s252 + $0x15] sm:$0x1f]
    %v334 = vld [vmem:[%s252 + $0x25] sm:$0x1f]
    %v335 = vld [vmem:[%s252 + $0x35] sm:$0x1f]
    %v336 = vld [vmem:[%s252 + $0x45] sm:$0x1f]
    %v337 = vld [vmem:[%s252 + $0xf5] sm:$0x1f]
    %v338 = vld [vmem:[%s252 + $0x105] sm:$0x1f]
    %v339 = vld [vmem:[%s252 + $0x115] sm:$0x1f]
    %v340 = vld [vmem:[%s252 + $0x125] sm:$0x1f]
    %v341 = vld [vmem:[%s252 + $0x135] sm:$0x1f]
    %v342 = vsel %vm25, %v332, 0.0
    %v343 = vsel %vm25, %v333, 0.0
    %v344 = vadd.f32 %v342, %v343
    %v345 = vsel %vm25, %v334, 0.0
    %v346 = vadd.f32 %v344, %v345
    %v347 = vsel %vm25, %v335, 0.0
    %v348 = vadd.f32 %v346, %v347
    %v349 = vsel %vm25, %v336, 0.0
    %v350 = vadd.f32 %v348, %v349
    %v351 = vsel %vm25, %v337, 0.0
    %v352 = vsel %vm25, %v338, 0.0
    %v353 = vadd.f32 %v351, %v352
    %v354 = vsel %vm25, %v339, 0.0
    %v355 = vadd.f32 %v353, %v354
    %v356 = vsel %vm25, %v340, 0.0
    %v357 = vadd.f32 %v355, %v356
    %v358 = vsel %vm25, %v341, 0.0
    %v359 = vadd.f32 %v357, %v358
    %v360 = vsel %vm25, %v350, 0.0
    %v361 = vrot.slane %v360, 4
    %v362 = vadd.f32 %v360, %v361
    %v363 = vrot.slane %v362, 2
    %v364 = vadd.f32 %v362, %v363
    %v365 = vrot.slane %v364, 1
    %v366 = vadd.f32 %v364, %v365
    %v367 = vsel %vm25, %v359, 0.0
    %v368 = vrot.slane %v367, 4
    %v369 = vadd.f32 %v367, %v368
    %v370 = vrot.slane %v369, 2
    %v371 = vadd.f32 %v369, %v370
    %v372 = vrot.slane %v371, 1
    %v373 = vadd.f32 %v371, %v372
    %v374 = vmul.f32 %v366, 0.04
    %v375 = vmul.f32 %v373, 0.04
    %s376 = scalar_lea.vmem %s1, 256
    %v377 = vld [vmem:[%s376] sm:$0xff]
    %v378 = vld [vmem:[%s376 + $0x8] sm:$0xff]
    %v379 = vld [vmem:[%s376 + $0x10] sm:$0xff]
    %v380 = vld [vmem:[%s376 + $0x18] sm:$0xff]
    %v381 = vld [vmem:[%s376 + $0x20] sm:$0xff]
    %v382 = vld [vmem:[%s376 + $0x28] sm:$0xff]
    %v383 = vld [vmem:[%s376 + $0x30] sm:$0xff]
    %v384 = vld [vmem:[%s376 + $0x38] sm:$0xff]
    %v387 = vsel %vm123, %v375, %v374
    %v388 = vsel %vm125, %v387, 0
    %390 = vmatpush.msra.mxu0 0.0
    %391 = vmatpush.msra.mxu0 0.0
    %392 = vmatpush.msra.mxu0 0.0
    %393 = vmatpush.msra.mxu0 0.0
    %394 = vmatpush.msra.mxu0 0.0
    %395 = vmatpush.msra.mxu0 0.0
    %396 = vmatpush.msra.mxu0 0.0
    %397 = vmatpush.msra.mxu0 0.0
    %398 = vmatpush.msra.mxu0 %v384
    %399 = vmatpush.msra.mxu0 %v383
    %400 = vmatpush.msra.mxu0 %v382
    %401 = vmatpush.msra.mxu0 %v381
    %402 = vmatpush.msra.mxu0 %v380
    %403 = vmatpush.msra.mxu0 %v379
    %404 = vmatpush.msra.mxu0 %v378
    %405 = vmatpush.msra.mxu0 %v377
    %406 = vmatmul.f32.gmra.mxu0 %v388
    %v407 = vpop.f32.mrf.mxu0
    %v408 = vadd.f32 0.0, %v407
    %409 = vdwg.mxu0
    %v410 = vadd.f32 %v331, %v408
    %v411 = vld [vmem:[%s252 + $0xa] sm:$0x1f]
    %v412 = vld [vmem:[%s252 + $0x1a] sm:$0x1f]
    %v413 = vld [vmem:[%s252 + $0x2a] sm:$0x1f]
    %v414 = vld [vmem:[%s252 + $0x3a] sm:$0x1f]
    %v415 = vld [vmem:[%s252 + $0x4a] sm:$0x1f]
    %v416 = vld [vmem:[%s252 + $0xfa] sm:$0x1f]
    %v417 = vld [vmem:[%s252 + $0x10a] sm:$0x1f]
    %v418 = vld [vmem:[%s252 + $0x11a] sm:$0x1f]
    %v419 = vld [vmem:[%s252 + $0x12a] sm:$0x1f]
    %v420 = vld [vmem:[%s252 + $0x13a] sm:$0x1f]
    %v421 = vsel %vm25, %v411, 0.0
    %v422 = vsel %vm25, %v412, 0.0
    %v423 = vadd.f32 %v421, %v422
    %v424 = vsel %vm25, %v413, 0.0
    %v425 = vadd.f32 %v423, %v424
    %v426 = vsel %vm25, %v414, 0.0
    %v427 = vadd.f32 %v425, %v426
    %v428 = vsel %vm25, %v415, 0.0
    %v429 = vadd.f32 %v427, %v428
    %v430 = vsel %vm25, %v416, 0.0
    %v431 = vsel %vm25, %v417, 0.0
    %v432 = vadd.f32 %v430, %v431
    %v433 = vsel %vm25, %v418, 0.0
    %v434 = vadd.f32 %v432, %v433
    %v435 = vsel %vm25, %v419, 0.0
    %v436 = vadd.f32 %v434, %v435
    %v437 = vsel %vm25, %v420, 0.0
    %v438 = vadd.f32 %v436, %v437
    %v439 = vsel %vm25, %v429, 0.0
    %v440 = vrot.slane %v439, 4
    %v441 = vadd.f32 %v439, %v440
    %v442 = vrot.slane %v441, 2
    %v443 = vadd.f32 %v441, %v442
    %v444 = vrot.slane %v443, 1
    %v445 = vadd.f32 %v443, %v444
    %v446 = vsel %vm25, %v438, 0.0
    %v447 = vrot.slane %v446, 4
    %v448 = vadd.f32 %v446, %v447
    %v449 = vrot.slane %v448, 2
    %v450 = vadd.f32 %v448, %v449
    %v451 = vrot.slane %v450, 1
    %v452 = vadd.f32 %v450, %v451
    %v453 = vmul.f32 %v445, 0.04
    %v454 = vmul.f32 %v452, 0.04
    %s455 = scalar_lea.vmem %s1, 320
    %v456 = vld [vmem:[%s455] sm:$0xff]
    %v457 = vld [vmem:[%s455 + $0x8] sm:$0xff]
    %v458 = vld [vmem:[%s455 + $0x10] sm:$0xff]
    %v459 = vld [vmem:[%s455 + $0x18] sm:$0xff]
    %v460 = vld [vmem:[%s455 + $0x20] sm:$0xff]
    %v461 = vld [vmem:[%s455 + $0x28] sm:$0xff]
    %v462 = vld [vmem:[%s455 + $0x30] sm:$0xff]
    %v463 = vld [vmem:[%s455 + $0x38] sm:$0xff]
    %v466 = vsel %vm123, %v454, %v453
    %v467 = vsel %vm125, %v466, 0
    %469 = vmatpush.msra.mxu0 0.0
    %470 = vmatpush.msra.mxu0 0.0
    %471 = vmatpush.msra.mxu0 0.0
    %472 = vmatpush.msra.mxu0 0.0
    %473 = vmatpush.msra.mxu0 0.0
    %474 = vmatpush.msra.mxu0 0.0
    %475 = vmatpush.msra.mxu0 0.0
    %476 = vmatpush.msra.mxu0 0.0
    %477 = vmatpush.msra.mxu0 %v463
    %478 = vmatpush.msra.mxu0 %v462
    %479 = vmatpush.msra.mxu0 %v461
    %480 = vmatpush.msra.mxu0 %v460
    %481 = vmatpush.msra.mxu0 %v459
    %482 = vmatpush.msra.mxu0 %v458
    %483 = vmatpush.msra.mxu0 %v457
    %484 = vmatpush.msra.mxu0 %v456
    %485 = vmatmul.f32.gmra.mxu0 %v467
    %v486 = vpop.f32.mrf.mxu0
    %v487 = vadd.f32 0.0, %v486
    %488 = vdwg.mxu0
    %v489 = vadd.f32 %v410, %v487
    %s490 = scalar_lea.vmem %s0, 160
    %v491 = vld [vmem:[%s490] sm:$0x1f]
    %v492 = vld [vmem:[%s490 + $0x10] sm:$0x1f]
    %v493 = vld [vmem:[%s490 + $0x20] sm:$0x1f]
    %v494 = vld [vmem:[%s490 + $0x30] sm:$0x1f]
    %v495 = vld [vmem:[%s490 + $0x40] sm:$0x1f]
    %v496 = vld [vmem:[%s490 + $0xf0] sm:$0x1f]
    %v497 = vld [vmem:[%s490 + $0x100] sm:$0x1f]
    %v498 = vld [vmem:[%s490 + $0x110] sm:$0x1f]
    %v499 = vld [vmem:[%s490 + $0x120] sm:$0x1f]
    %v500 = vld [vmem:[%s490 + $0x130] sm:$0x1f]
    %v501 = vsel %vm25, %v491, 0.0
    %v502 = vsel %vm25, %v492, 0.0
    %v503 = vadd.f32 %v501, %v502
    %v504 = vsel %vm25, %v493, 0.0
    %v505 = vadd.f32 %v503, %v504
    %v506 = vsel %vm25, %v494, 0.0
    %v507 = vadd.f32 %v505, %v506
    %v508 = vsel %vm25, %v495, 0.0
    %v509 = vadd.f32 %v507, %v508
    %v510 = vsel %vm25, %v496, 0.0
    %v511 = vsel %vm25, %v497, 0.0
    %v512 = vadd.f32 %v510, %v511
    %v513 = vsel %vm25, %v498, 0.0
    %v514 = vadd.f32 %v512, %v513
    %v515 = vsel %vm25, %v499, 0.0
    %v516 = vadd.f32 %v514, %v515
    %v517 = vsel %vm25, %v500, 0.0
    %v518 = vadd.f32 %v516, %v517
    %v519 = vsel %vm25, %v509, 0.0
    %v520 = vrot.slane %v519, 4
    %v521 = vadd.f32 %v519, %v520
    %v522 = vrot.slane %v521, 2
    %v523 = vadd.f32 %v521, %v522
    %v524 = vrot.slane %v523, 1
    %v525 = vadd.f32 %v523, %v524
    %v526 = vsel %vm25, %v518, 0.0
    %v527 = vrot.slane %v526, 4
    %v528 = vadd.f32 %v526, %v527
    %v529 = vrot.slane %v528, 2
    %v530 = vadd.f32 %v528, %v529
    %v531 = vrot.slane %v530, 1
    %v532 = vadd.f32 %v530, %v531
    %v533 = vmul.f32 %v525, 0.04
    %v534 = vmul.f32 %v532, 0.04
    %s535 = scalar_lea.vmem %s1, 384
    %v536 = vld [vmem:[%s535] sm:$0xff]
    %v537 = vld [vmem:[%s535 + $0x8] sm:$0xff]
    %v538 = vld [vmem:[%s535 + $0x10] sm:$0xff]
    %v539 = vld [vmem:[%s535 + $0x18] sm:$0xff]
    %v540 = vld [vmem:[%s535 + $0x20] sm:$0xff]
    %v541 = vld [vmem:[%s535 + $0x28] sm:$0xff]
    %v542 = vld [vmem:[%s535 + $0x30] sm:$0xff]
    %v543 = vld [vmem:[%s535 + $0x38] sm:$0xff]
    %v546 = vsel %vm123, %v534, %v533
    %v547 = vsel %vm125, %v546, 0
    %549 = vmatpush.msra.mxu0 0.0
    %550 = vmatpush.msra.mxu0 0.0
    %551 = vmatpush.msra.mxu0 0.0
    %552 = vmatpush.msra.mxu0 0.0
    %553 = vmatpush.msra.mxu0 0.0
    %554 = vmatpush.msra.mxu0 0.0
    %555 = vmatpush.msra.mxu0 0.0
    %556 = vmatpush.msra.mxu0 0.0
    %557 = vmatpush.msra.mxu0 %v543
    %558 = vmatpush.msra.mxu0 %v542
    %559 = vmatpush.msra.mxu0 %v541
    %560 = vmatpush.msra.mxu0 %v540
    %561 = vmatpush.msra.mxu0 %v539
    %562 = vmatpush.msra.mxu0 %v538
    %563 = vmatpush.msra.mxu0 %v537
    %564 = vmatpush.msra.mxu0 %v536
    %565 = vmatmul.f32.gmra.mxu0 %v547
    %v566 = vpop.f32.mrf.mxu0
    %v567 = vadd.f32 0.0, %v566
    %568 = vdwg.mxu0
    %v569 = vadd.f32 %v489, %v567
    %v570 = vld [vmem:[%s490 + $0x5] sm:$0x1f]
    %v571 = vld [vmem:[%s490 + $0x15] sm:$0x1f]
    %v572 = vld [vmem:[%s490 + $0x25] sm:$0x1f]
    %v573 = vld [vmem:[%s490 + $0x35] sm:$0x1f]
    %v574 = vld [vmem:[%s490 + $0x45] sm:$0x1f]
    %v575 = vld [vmem:[%s490 + $0xf5] sm:$0x1f]
    %v576 = vld [vmem:[%s490 + $0x105] sm:$0x1f]
    %v577 = vld [vmem:[%s490 + $0x115] sm:$0x1f]
    %v578 = vld [vmem:[%s490 + $0x125] sm:$0x1f]
    %v579 = vld [vmem:[%s490 + $0x135] sm:$0x1f]
    %v580 = vsel %vm25, %v570, 0.0
    %v581 = vsel %vm25, %v571, 0.0
    %v582 = vadd.f32 %v580, %v581
    %v583 = vsel %vm25, %v572, 0.0
    %v584 = vadd.f32 %v582, %v583
    %v585 = vsel %vm25, %v573, 0.0
    %v586 = vadd.f32 %v584, %v585
    %v587 = vsel %vm25, %v574, 0.0
    %v588 = vadd.f32 %v586, %v587
    %v589 = vsel %vm25, %v575, 0.0
    %v590 = vsel %vm25, %v576, 0.0
    %v591 = vadd.f32 %v589, %v590
    %v592 = vsel %vm25, %v577, 0.0
    %v593 = vadd.f32 %v591, %v592
    %v594 = vsel %vm25, %v578, 0.0
    %v595 = vadd.f32 %v593, %v594
    %v596 = vsel %vm25, %v579, 0.0
    %v597 = vadd.f32 %v595, %v596
    %v598 = vsel %vm25, %v588, 0.0
    %v599 = vrot.slane %v598, 4
    %v600 = vadd.f32 %v598, %v599
    %v601 = vrot.slane %v600, 2
    %v602 = vadd.f32 %v600, %v601
    %v603 = vrot.slane %v602, 1
    %v604 = vadd.f32 %v602, %v603
    %v605 = vsel %vm25, %v597, 0.0
    %v606 = vrot.slane %v605, 4
    %v607 = vadd.f32 %v605, %v606
    %v608 = vrot.slane %v607, 2
    %v609 = vadd.f32 %v607, %v608
    %v610 = vrot.slane %v609, 1
    %v611 = vadd.f32 %v609, %v610
    %v612 = vmul.f32 %v604, 0.04
    %v613 = vmul.f32 %v611, 0.04
    %s614 = scalar_lea.vmem %s1, 448
    %v615 = vld [vmem:[%s614] sm:$0xff]
    %v616 = vld [vmem:[%s614 + $0x8] sm:$0xff]
    %v617 = vld [vmem:[%s614 + $0x10] sm:$0xff]
    %v618 = vld [vmem:[%s614 + $0x18] sm:$0xff]
    %v619 = vld [vmem:[%s614 + $0x20] sm:$0xff]
    %v620 = vld [vmem:[%s614 + $0x28] sm:$0xff]
    %v621 = vld [vmem:[%s614 + $0x30] sm:$0xff]
    %v622 = vld [vmem:[%s614 + $0x38] sm:$0xff]
    %v625 = vsel %vm123, %v613, %v612
    %v626 = vsel %vm125, %v625, 0
    %628 = vmatpush.msra.mxu0 0.0
    %629 = vmatpush.msra.mxu0 0.0
    %630 = vmatpush.msra.mxu0 0.0
    %631 = vmatpush.msra.mxu0 0.0
    %632 = vmatpush.msra.mxu0 0.0
    %633 = vmatpush.msra.mxu0 0.0
    %634 = vmatpush.msra.mxu0 0.0
    %635 = vmatpush.msra.mxu0 0.0
    %636 = vmatpush.msra.mxu0 %v622
    %637 = vmatpush.msra.mxu0 %v621
    %638 = vmatpush.msra.mxu0 %v620
    %639 = vmatpush.msra.mxu0 %v619
    %640 = vmatpush.msra.mxu0 %v618
    %641 = vmatpush.msra.mxu0 %v617
    %642 = vmatpush.msra.mxu0 %v616
    %643 = vmatpush.msra.mxu0 %v615
    %644 = vmatmul.f32.gmra.mxu0 %v626
    %v645 = vpop.f32.mrf.mxu0
    %v646 = vadd.f32 0.0, %v645
    %647 = vdwg.mxu0
    %v648 = vadd.f32 %v569, %v646
    %v649 = vld [vmem:[%s490 + $0xa] sm:$0x1f]
    %v650 = vld [vmem:[%s490 + $0x1a] sm:$0x1f]
    %v651 = vld [vmem:[%s490 + $0x2a] sm:$0x1f]
    %v652 = vld [vmem:[%s490 + $0x3a] sm:$0x1f]
    %v653 = vld [vmem:[%s490 + $0x4a] sm:$0x1f]
    %v654 = vld [vmem:[%s490 + $0xfa] sm:$0x1f]
    %v655 = vld [vmem:[%s490 + $0x10a] sm:$0x1f]
    %v656 = vld [vmem:[%s490 + $0x11a] sm:$0x1f]
    %v657 = vld [vmem:[%s490 + $0x12a] sm:$0x1f]
    %v658 = vld [vmem:[%s490 + $0x13a] sm:$0x1f]
    %v659 = vsel %vm25, %v649, 0.0
    %v660 = vsel %vm25, %v650, 0.0
    %v661 = vadd.f32 %v659, %v660
    %v662 = vsel %vm25, %v651, 0.0
    %v663 = vadd.f32 %v661, %v662
    %v664 = vsel %vm25, %v652, 0.0
    %v665 = vadd.f32 %v663, %v664
    %v666 = vsel %vm25, %v653, 0.0
    %v667 = vadd.f32 %v665, %v666
    %v668 = vsel %vm25, %v654, 0.0
    %v669 = vsel %vm25, %v655, 0.0
    %v670 = vadd.f32 %v668, %v669
    %v671 = vsel %vm25, %v656, 0.0
    %v672 = vadd.f32 %v670, %v671
    %v673 = vsel %vm25, %v657, 0.0
    %v674 = vadd.f32 %v672, %v673
    %v675 = vsel %vm25, %v658, 0.0
    %v676 = vadd.f32 %v674, %v675
    %v677 = vsel %vm25, %v667, 0.0
    %v678 = vrot.slane %v677, 4
    %v679 = vadd.f32 %v677, %v678
    %v680 = vrot.slane %v679, 2
    %v681 = vadd.f32 %v679, %v680
    %v682 = vrot.slane %v681, 1
    %v683 = vadd.f32 %v681, %v682
    %v684 = vsel %vm25, %v676, 0.0
    %v685 = vrot.slane %v684, 4
    %v686 = vadd.f32 %v684, %v685
    %v687 = vrot.slane %v686, 2
    %v688 = vadd.f32 %v686, %v687
    %v689 = vrot.slane %v688, 1
    %v690 = vadd.f32 %v688, %v689
    %v691 = vmul.f32 %v683, 0.04
    %v692 = vmul.f32 %v690, 0.04
    %s693 = scalar_lea.vmem %s1, 512
    %v694 = vld [vmem:[%s693] sm:$0xff]
    %v695 = vld [vmem:[%s693 + $0x8] sm:$0xff]
    %v696 = vld [vmem:[%s693 + $0x10] sm:$0xff]
    %v697 = vld [vmem:[%s693 + $0x18] sm:$0xff]
    %v698 = vld [vmem:[%s693 + $0x20] sm:$0xff]
    %v699 = vld [vmem:[%s693 + $0x28] sm:$0xff]
    %v700 = vld [vmem:[%s693 + $0x30] sm:$0xff]
    %v701 = vld [vmem:[%s693 + $0x38] sm:$0xff]
    %v704 = vsel %vm123, %v692, %v691
    %v705 = vsel %vm125, %v704, 0
    %707 = vmatpush.msra.mxu0 0.0
    %708 = vmatpush.msra.mxu0 0.0
    %709 = vmatpush.msra.mxu0 0.0
    %710 = vmatpush.msra.mxu0 0.0
    %711 = vmatpush.msra.mxu0 0.0
    %712 = vmatpush.msra.mxu0 0.0
    %713 = vmatpush.msra.mxu0 0.0
    %714 = vmatpush.msra.mxu0 0.0
    %715 = vmatpush.msra.mxu0 %v701
    %716 = vmatpush.msra.mxu0 %v700
    %717 = vmatpush.msra.mxu0 %v699
    %718 = vmatpush.msra.mxu0 %v698
    %719 = vmatpush.msra.mxu0 %v697
    %720 = vmatpush.msra.mxu0 %v696
    %721 = vmatpush.msra.mxu0 %v695
    %722 = vmatpush.msra.mxu0 %v694
    %723 = vmatmul.f32.gmra.mxu0 %v705
    %v724 = vpop.f32.mrf.mxu0
    %v725 = vadd.f32 0.0, %v724
    %726 = vdwg.mxu0
    %v727 = vadd.f32 %v648, %v725
    %v728 = vld [vmem:[%s2] sm:$0x1]
    %v730 = vperm.slane %v728, 0
    %v732 = vadd.f32 %v727, %v730
    %vm733 = vcmask 33792
    %734 = vst.msk [vmem:[#allocation2] sm:$0x3] %vm733, %v732
    // Predicated region
    $region14: #{outlayer_forward.1} parent=1 // pred_check
      _
    $region15: #{outlayer_forward.1} parent=1 // pred_check_branch
      %736 = sbr.rel (0) target = $region17
    $region16: #{outlayer_forward.1} parent=1 // pred_region
      %738 = vsyncadd [#allocation3], 0
      %s740 = sshll.u32 [#allocation2], 4
      %s741 = int_to_ptr.vmem [resolvable:$true] %s740
      %s742 = sshll.u32 %s3, 4
      %s743 = int_to_ptr.hbm [resolvable:$true] %s742
      %745 = dma.vmem_to_hbm [thread:$0]  %s741, 32, %s743, [#allocation3]
    $region17: #{outlayer_forward.1} parent=1 // pred_fallthru
      _
    // Predicated region
    $region18: #{outlayer_forward.1} parent=1 // pred_check
      _
    $region19: #{outlayer_forward.1} parent=1 // pred_check_branch
      %747 = sbr.rel (0) target = $region21
    $region20: #{outlayer_forward.1} parent=1 // pred_region
      %749 = dma.done [#allocation3], 32
    $region21: #{outlayer_forward.1} parent=1 // pred_fallthru
      _
    %750 = vsyncpa [#allocation3], 1

</llo_original>
